<compile_context>
chip_gen: v7x
topology: tpu7x:2x2x1
jax: 0.10.0
libtpu: 0.0.40
codegen_flags: <defaults>
</compile_context>

<pallas_src>
import functools

import jax
import jax.numpy as jnp
from jax.experimental import pallas as pl
from jax.experimental.pallas import tpu as pltpu


def _tpu_vmem_and_cores():
    """Best-effort per-core VMEM capacity and TensorCore count."""
    vmem = 64 * 1024 * 1024     # conservative fallback (v7x per-core VMEM)
    cores = 1
    try:
        info = pltpu.get_tpu_info()
        cap = int(getattr(info, "vmem_capacity_bytes", 0) or 0)
        if cap > 0:
            vmem = cap
        for attr in ("num_tensorcores", "tensorcore_count", "num_cores", "core_count"):
            v = getattr(info, attr, None)
            if isinstance(v, int) and v > 1:
                cores = v
                break
    except Exception:
        pass
    return vmem, cores


def _ensemble_encoder_kernel(x_ref, w_ref, b_ref, m_ref, mb_ref, h_ref, *,
                             seq_tile, batch):
    s = pl.program_id(1)

    @pl.when(s == 0)
    def _init():
        h_ref[...] = jnp.zeros_like(h_ref)

    # (seq_tile*B, D) @ (D, E*H) on the MXU, f32 accumulation; bias+tanh in f32.
    y = jnp.dot(x_ref[...], w_ref[...], preferred_element_type=jnp.float32)
    y = jnp.tanh(y + b_ref[...].astype(jnp.float32))

    # Lane-dense memory-bank slab store (bf16 if the caller asked for it).
    mb_ref[...] = y.astype(mb_ref.dtype)

    # Per-batch masked seq-sum for the hidden state — no MXU, no selector.
    ym = y * m_ref[...]                              # zero padded positions
    rows, n = ym.shape
    if batch % 8 == 0:
        # (seq_tile, B, N) is a sublane-aligned view; reduce over the seq axis.
        h_partial = jnp.sum(ym.reshape(seq_tile, batch, n), axis=0)
    elif rows % 8 == 0 and 8 % batch == 0:
        # Fold aligned groups of 8 rows first (vreg-wise adds over the major
        # axis), then combine the 8//B interleaved partials with a few static
        # sublane slices.  Row r belongs to batch r % B, and B | 8 guarantees
        # (r % 8) % B == r % B, so the grouping is consistent.
        p8 = jnp.sum(ym.reshape(rows // 8, 8, n), axis=0)           # (8, N)
        h_partial = p8[0:batch, :]
        for t in range(1, 8 // batch):
            h_partial = h_partial + p8[t * batch:(t + 1) * batch, :]
    else:
        # General fallback: short unrolled strided adds (seq_tile is capped by
        # the tile chooser in this case).
        h_partial = ym[0:batch, :]
        for t in range(1, seq_tile):
            h_partial = h_partial + ym[t * batch:(t + 1) * batch, :]

    h_ref[...] += h_partial[None, :, :]


def _choose_seq_tile(S, B, D, N, in_itemsize, w_itemsize, mb_itemsize, budget_bytes):
    """Largest divisor t of S whose (double-buffered) tiles fit the VMEM budget."""

    def est(t):
        rows = t * B
        return (2 * rows * D * in_itemsize          # src tiles (double-buffered)
                + 2 * rows * 4                      # mask tiles
                + 2 * rows * N * mb_itemsize        # memory-bank output tiles
                + 2 * (D * N + N) * w_itemsize      # weights + bias (x2 even if resident)
                + 2 * B * N * 4                     # hidden accumulator block
                + rows * N * 4)                     # f32 activation temporary

    divisors = [t for t in range(1, S + 1) if S % t == 0]
    aligned = [t for t in divisors if (t * B) % 8 == 0 or t == S]
    if not aligned:
        aligned = [S]
    awkward_batch = (B % 8 != 0) and (8 % B != 0)   # unrolled fallback path
    fitting = [t for t in aligned
               if est(t) <= budget_bytes and not (awkward_batch and t > 256)]
    return max(fitting) if fitting else min(aligned)


def ensemble_encoder(src, weights, biases, lengths=None, *,
                     seq_tile=None, seq_split=None, mb_dtype=None,
                     fused_output=True):
    """src: (S, B, D); weights: (E, D, H); biases: (E, H); lengths: (B,) or None.

    Returns (enc_hidden, memory_bank, lengths).
      enc_hidden : tuple of E arrays (B, H)  — masked seq-mean per member.
      memory_bank: fused (S, B, E, H) array by default (kernel-native layout,
                   free reshape); with fused_output=False a tuple of E (S, B, H)
                   arrays (expensive: re-lays-out the largest tensor in HBM).
    Pass bf16 src/weights and/or mb_dtype=jnp.bfloat16 to halve HBM traffic.
    """
    S, B, D = src.shape
    E, D2, H = weights.shape
    assert D2 == D and biases.shape == (E, H)
    N = E * H
    N_pad = ((N + 127) // 128) * 128        # lane-dense fused N dim
    mb_dtype = jnp.dtype(src.dtype if mb_dtype is None else mb_dtype)

    vmem_cap, n_cores = _tpu_vmem_and_cores()
    vmem_limit = max(32 << 20, min(int(0.80 * vmem_cap), vmem_cap - (4 << 20)))
    budget = int(0.70 * vmem_limit)

    # Fuse the ensemble dim into the matmul N dim (wrapper-side; tiny tensors).
    w_fused = jnp.transpose(weights, (1, 0, 2)).reshape(D, N)     # (D, E*H)
    b_fused = biases.reshape(1, N)                                # (1, E*H)
    if N_pad != N:
        w_fused = jnp.pad(w_fused, ((0, 0), (0, N_pad - N)))
        b_fused = jnp.pad(b_fused, ((0, 0), (0, N_pad - N)))
    src2d = src.reshape(S * B, D)                                 # rows ordered (s, b)

    if seq_tile is None:
        seq_tile = _choose_seq_tile(S, B, D, N_pad, src.dtype.itemsize,
                                    w_fused.dtype.itemsize, mb_dtype.itemsize,
                                    budget)
    if S % seq_tile:
        raise ValueError(f"seq_tile={seq_tile} must divide S={S}")
    rows = seq_tile * B
    if rows % 8 and rows != S * B:
        raise ValueError("seq_tile*B must be a multiple of 8 (or cover the array)")

    steps_total = S // seq_tile
    if seq_split is None:
        seq_split = n_cores if (n_cores > 1 and steps_total % n_cores == 0) else 1
    if steps_total % seq_split:
        raise ValueError(f"seq_split={seq_split} must divide {steps_total} seq chunks")
    steps = steps_total // seq_split

    # Validity mask for the hidden mean (memory_bank keeps padded positions).
    if lengths is None:
        mask = jnp.ones((S * B, 1), jnp.float32)
        denom = jnp.float32(S)
    else:
        valid = (jnp.arange(S, dtype=jnp.int32)[:, None]
                 < lengths[None, :].astype(jnp.int32))             # (S, B)
        mask = valid.astype(jnp.float32).reshape(S * B, 1)
        denom = jnp.maximum(lengths.astype(jnp.float32), 1.0)[:, None]   # (B, 1)

    kernel = functools.partial(_ensemble_encoder_kernel,
                               seq_tile=seq_tile, batch=B)

    mb_flat, hid = pl.pallas_call(
        kernel,
        out_shape=(
            jax.ShapeDtypeStruct((S * B, N_pad), mb_dtype),        # memory bank (fused)
            jax.ShapeDtypeStruct((seq_split, B, N_pad), jnp.float32),  # hidden partial sums
        ),
        grid_spec=pltpu.PrefetchScalarGridSpec(
            num_scalar_prefetch=0,
            grid=(seq_split, steps),                               # (parallel, arbitrary)
            in_specs=[
                pl.BlockSpec((rows, D), lambda c, s: (c * steps + s, 0)),   # src chunk
                pl.BlockSpec((D, N_pad), lambda c, s: (0, 0)),              # fused W (resident)
                pl.BlockSpec((1, N_pad), lambda c, s: (0, 0)),              # fused bias (resident)
                pl.BlockSpec((rows, 1), lambda c, s: (c * steps + s, 0)),   # validity mask
            ],
            out_specs=[
                pl.BlockSpec((rows, N_pad), lambda c, s: (c * steps + s, 0)),  # memory-bank slab
                pl.BlockSpec((1, B, N_pad), lambda c, s: (c, 0, 0)),           # hidden accumulator
            ],
        ),
        compiler_params=pltpu.CompilerParams(
            dimension_semantics=("parallel", "arbitrary"),
            vmem_limit_bytes=int(vmem_limit),
        ),
    )(src2d, w_fused, b_fused, mask)

    # Hidden state: sum the per-split partials (tiny), divide by valid lengths.
    hsum = jnp.sum(hid, axis=0)[:, :N]                             # (B, E*H) f32
    enc = (hsum / denom).reshape(B, E, H).transpose(1, 0, 2).astype(src.dtype)
    enc_hidden = tuple(enc[e] for e in range(E))

    mb = mb_flat if N_pad == N else mb_flat[:, :N]                 # slice only if padded
    memory_bank_fused = mb.reshape(S, B, E, H)                     # free view of kernel layout

    if fused_output:
        return enc_hidden, memory_bank_fused, lengths

    # Legacy per-member tuples (OpenNMT layout) — re-touches the big tensor in HBM.
    mb_members = memory_bank_fused.transpose(2, 0, 1, 3)           # (E, S, B, H)
    return enc_hidden, tuple(mb_members[e] for e in range(E)), lengths


if __name__ == "__main__":
    key = jax.random.PRNGKey(0)
    S, B, D, H, E = 8, 2, 32, 64, 2      # seq, batch, input dim, hidden, ensemble size

    k_src, k_w, k_b = jax.random.split(key, 3)
    src = jax.random.normal(k_src, (S, B, D), dtype=jnp.float32)
    weights = 0.1 * jax.random.normal(k_w, (E, D, H), dtype=jnp.float32)
    biases = 0.1 * jax.random.normal(k_b, (E, H), dtype=jnp.float32)
    lengths = jnp.array([8, 5], dtype=jnp.int32)                   # ragged lengths

    # ---- f32 run, fused output contract, 2 seq chunks ----
    enc_hidden, memory_bank, out_lengths = ensemble_encoder(
        src, weights, biases, lengths, seq_tile=4)
    jax.block_until_ready((enc_hidden, memory_bank))

    valid = (jnp.arange(S)[:, None] < lengths[None, :]).astype(jnp.float32)  # (S, B)
    for e in range(E):
        ref_mb = jnp.tanh(src @ weights[e] + biases[e])                      # (S, B, H)
        ref_h = (ref_mb * valid[:, :, None]).sum(0) / lengths[:, None].astype(jnp.float32)
        assert jnp.allclose(memory_bank[:, :, e, :], ref_mb, atol=2e-3, rtol=2e-3), \
            "memory_bank mismatch"
        assert jnp.allclose(enc_hidden[e], ref_h, atol=2e-3, rtol=2e-3), \
            "enc_hidden mismatch"
    assert out_lengths is lengths

    # ---- bf16 storage run (halves HBM traffic), legacy per-member tuples ----
    enc_h16, mb16, _ = ensemble_encoder(
        src.astype(jnp.bfloat16), weights.astype(jnp.bfloat16),
        biases.astype(jnp.bfloat16), None,
        mb_dtype=jnp.bfloat16, fused_output=False)
    jax.block_until_ready((enc_h16, mb16))
    for e in range(E):
        ref_mb = jnp.tanh(src @ weights[e] + biases[e])
        ref_h = ref_mb.mean(axis=0)
        assert jnp.allclose(mb16[e].astype(jnp.float32), ref_mb, atol=3e-2, rtol=3e-2), \
            "bf16 memory_bank mismatch"
        assert jnp.allclose(enc_h16[e].astype(jnp.float32), ref_h, atol=3e-2, rtol=3e-2), \
            "bf16 enc_hidden mismatch"

    print("KERNEL_OK")
</pallas_src>

<mosaic_0001>
module attributes {stable_mosaic.version = 11 : i64} {
  func.func @_ensemble_encoder_kernel(%arg0: i32, %arg1: i32, %arg2: memref<8x32xf32, #tpu.memory_space<vmem>>, %arg3: memref<32x128xf32, #tpu.memory_space<vmem>>, %arg4: memref<1x128xf32, #tpu.memory_space<vmem>>, %arg5: memref<8x1xf32, #tpu.memory_space<vmem>>, %arg6: memref<8x128xf32, #tpu.memory_space<vmem>>, %arg7: memref<1x2x128xf32, #tpu.memory_space<vmem>>) attributes {dimension_semantics = [#tpu.dimension_semantics<parallel>, #tpu.dimension_semantics<arbitrary>], iteration_bounds = array<i64: 1, 2>, scalar_prefetch = 0 : i64, scratch_operands = 0 : i64, tpu.core_type = #tpu.core_type<tc>, window_params = [{transform_indices = @transform_0, window_bounds = array<i64: 8, 32>}, {pipeline_mode = #tpu.pipeline_mode<synchronous>, transform_indices = @transform_1, window_bounds = array<i64: 32, 128>}, {pipeline_mode = #tpu.pipeline_mode<synchronous>, transform_indices = @transform_2, window_bounds = array<i64: 1, 128>}, {transform_indices = @transform_3, window_bounds = array<i64: 8, 1>}, {transform_indices = @transform_4, window_bounds = array<i64: 8, 128>}, {transform_indices = @transform_5, window_bounds = array<i64: 1, 2, 128>}]} {
    %c0_i32 = arith.constant 0 : i32
    %0 = arith.cmpi eq, %arg1, %c0_i32 : i32
    %1 = arith.extui %0 : i1 to i32
    %c0_i32_0 = arith.constant 0 : i32
    %2 = arith.cmpi ne, %1, %c0_i32_0 : i32
    scf.if %2 {
      %cst_17 = arith.constant 0.000000e+00 : f32
      %27 = vector.broadcast %cst_17 : f32 to vector<1x2x128xf32>
      %c0_18 = arith.constant 0 : index
      %c0_19 = arith.constant 0 : index
      %c0_20 = arith.constant 0 : index
      %28 = vector.load %arg7[%c0_18, %c0_19, %c0_20] : memref<1x2x128xf32, #tpu.memory_space<vmem>>, vector<1x2x128xf32>
      tpu.vector_store %arg7[%c0_18, %c0_19, %c0_20], %27 {strides = array<i32>} : memref<1x2x128xf32, #tpu.memory_space<vmem>>, vector<1x2x128xf32>,
    } else {
    }
    %c0 = arith.constant 0 : index
    %c0_1 = arith.constant 0 : index
    %3 = vector.load %arg2[%c0, %c0_1] : memref<8x32xf32, #tpu.memory_space<vmem>>, vector<8x32xf32>
    %c0_2 = arith.constant 0 : index
    %c0_3 = arith.constant 0 : index
    %4 = vector.load %arg3[%c0_2, %c0_3] : memref<32x128xf32, #tpu.memory_space<vmem>>, vector<32x128xf32>
    %cst = arith.constant dense<0.000000e+00> : vector<8x128xf32>
    %5 = tpu.matmul %3, %4, %cst {dimension_numbers = #tpu.dot_dimension_numbers<[1], [0], [0], [1], [0, 0, 1, 1], [], []>} : vector<8x32xf32>, vector<32x128xf32>, vector<8x128xf32> -> vector<8x128xf32>
    %c0_4 = arith.constant 0 : index
    %c0_5 = arith.constant 0 : index
    %6 = vector.load %arg4[%c0_4, %c0_5] : memref<1x128xf32, #tpu.memory_space<vmem>>, vector<1x128xf32>
    %7 = vector.broadcast %6 : vector<1x128xf32> to vector<8x128xf32>
    %8 = arith.addf %5, %7 : vector<8x128xf32>
    %9 = math.tanh %8 : vector<8x128xf32>
    %c0_6 = arith.constant 0 : index
    %c0_7 = arith.constant 0 : index
    %10 = vector.load %arg6[%c0_6, %c0_7] : memref<8x128xf32, #tpu.memory_space<vmem>>, vector<8x128xf32>
    tpu.vector_store %arg6[%c0_6, %c0_7], %9 {strides = array<i32>} : memref<8x128xf32, #tpu.memory_space<vmem>>, vector<8x128xf32>,
    %c0_8 = arith.constant 0 : index
    %c0_9 = arith.constant 0 : index
    %11 = vector.load %arg5[%c0_8, %c0_9] : memref<8x1xf32, #tpu.memory_space<vmem>>, vector<8x1xf32>
    %12 = vector.broadcast %11 : vector<8x1xf32> to vector<8x128xf32>
    %13 = arith.mulf %9, %12 : vector<8x128xf32>
    %14 = vector.shape_cast %13 : vector<8x128xf32> to vector<1x8x128xf32>
    %cst_10 = arith.constant dense<0.000000e+00> : vector<8x128xf32>
    %15 = vector.multi_reduction <add>, %14, %cst_10 [0] : vector<1x8x128xf32> to vector<8x128xf32>
    %16 = vector.extract_strided_slice %15 {offsets = [0, 0], sizes = [2, 128], strides = [1, 1]} : vector<8x128xf32> to vector<2x128xf32>
    %17 = vector.extract_strided_slice %15 {offsets = [2, 0], sizes = [2, 128], strides = [1, 1]} : vector<8x128xf32> to vector<2x128xf32>
    %18 = arith.addf %16, %17 : vector<2x128xf32>
    %19 = vector.extract_strided_slice %15 {offsets = [4, 0], sizes = [2, 128], strides = [1, 1]} : vector<8x128xf32> to vector<2x128xf32>
    %20 = arith.addf %18, %19 : vector<2x128xf32>
    %21 = vector.extract_strided_slice %15 {offsets = [6, 0], sizes = [2, 128], strides = [1, 1]} : vector<8x128xf32> to vector<2x128xf32>
    %22 = arith.addf %20, %21 : vector<2x128xf32>
    %c0_11 = arith.constant 0 : index
    %c0_12 = arith.constant 0 : index
    %c0_13 = arith.constant 0 : index
    %23 = vector.load %arg7[%c0_11, %c0_12, %c0_13] : memref<1x2x128xf32, #tpu.memory_space<vmem>>, vector<1x2x128xf32>
    %24 = vector.shape_cast %22 : vector<2x128xf32> to vector<1x2x128xf32>
    %25 = arith.addf %23, %24 : vector<1x2x128xf32>
    %c0_14 = arith.constant 0 : index
    %c0_15 = arith.constant 0 : index
    %c0_16 = arith.constant 0 : index
    %26 = vector.load %arg7[%c0_14, %c0_15, %c0_16] : memref<1x2x128xf32, #tpu.memory_space<vmem>>, vector<1x2x128xf32>
    tpu.vector_store %arg7[%c0_14, %c0_15, %c0_16], %25 {strides = array<i32>} : memref<1x2x128xf32, #tpu.memory_space<vmem>>, vector<1x2x128xf32>,
    return
  }
  func.func @transform_0(%arg0: i32, %arg1: i32) -> (i32, i32) {
    %c2_i32 = arith.constant 2 : i32
    %0 = arith.muli %arg0, %c2_i32 : i32
    %1 = arith.addi %0, %arg1 : i32
    %c0_i32 = arith.constant 0 : i32
    %c0_i32_0 = arith.constant 0 : i32
    return %1, %c0_i32 : i32, i32
  }
  func.func @transform_1(%arg0: i32, %arg1: i32) -> (i32, i32) {
    %c0_i32 = arith.constant 0 : i32
    %c0_i32_0 = arith.constant 0 : i32
    %c0_i32_1 = arith.constant 0 : i32
    return %c0_i32, %c0_i32_0 : i32, i32
  }
  func.func @transform_2(%arg0: i32, %arg1: i32) -> (i32, i32) {
    %c0_i32 = arith.constant 0 : i32
    %c0_i32_0 = arith.constant 0 : i32
    %c0_i32_1 = arith.constant 0 : i32
    return %c0_i32, %c0_i32_0 : i32, i32
  }
  func.func @transform_3(%arg0: i32, %arg1: i32) -> (i32, i32) {
    %c2_i32 = arith.constant 2 : i32
    %0 = arith.muli %arg0, %c2_i32 : i32
    %1 = arith.addi %0, %arg1 : i32
    %c0_i32 = arith.constant 0 : i32
    %c0_i32_0 = arith.constant 0 : i32
    return %1, %c0_i32 : i32, i32
  }
  func.func @transform_4(%arg0: i32, %arg1: i32) -> (i32, i32) {
    %c2_i32 = arith.constant 2 : i32
    %0 = arith.muli %arg0, %c2_i32 : i32
    %1 = arith.addi %0, %arg1 : i32
    %c0_i32 = arith.constant 0 : i32
    %c0_i32_0 = arith.constant 0 : i32
    return %1, %c0_i32 : i32, i32
  }
  func.func @transform_5(%arg0: i32, %arg1: i32) -> (i32, i32, i32) {
    %c0_i32 = arith.constant 0 : i32
    %c0_i32_0 = arith.constant 0 : i32
    %c0_i32_1 = arith.constant 0 : i32
    return %arg0, %c0_i32, %c0_i32_0 : i32, i32, i32
  }
}

</mosaic_0001>

<llo_original>
// kernel: tpu_custom_call.1
$region0: #{tpu_custom_call.1}
  #allocation0 [shape = 'u32[]', space=smem, size = 0x4, offset = 0x4, fixed_abs, tag = 'smem constant byte address 0x4 - core index']
  #allocation1 [shape = 'u32[144,128]{1,0:T(1,128)}', space=vmem, size = 0x12000, scoped, tag = 'internal scratch']
  %s0 = inlined_call_operand.vmem [shape: f32[16,32], index: 0, kind: input, shape index: {}]
  %s1 = inlined_call_operand.hbm [shape: f32[32,128], index: 1, kind: input, shape index: {}]
  %s2 = inlined_call_operand.vmem [shape: f32[1,128], index: 2, kind: input, shape index: {}]
  %s3 = inlined_call_operand.vmem [shape: f32[16,1], index: 3, kind: input, shape index: {}]
  %s4 = inlined_call_operand.hbm [shape: f32[16,128], index: 4, kind: output, shape index: {0}]
  %s5 = inlined_call_operand.hbm [shape: f32[1,2,128], index: 5, kind: output, shape index: {1}]
  %6 = xla_tuple %s4, %s5
  %s7 = sld [smem:[#allocation0]]
  $region65: #{tpu_custom_call.1} parent=0
    _
  %s9 = ssub.s32 1, %s7
  %s10 = scalar_select 0, %s9, %s7
  $region1: #{tpu_custom_call.1} parent=0
    #allocation2 [shape = 'u8[16384]{0}', space=vmem, size = 0x4000, scoped, tag = 'input window, operand 1, single buffered']
    #allocation3 [shape = 's32[2]{0}', space=sflag, size = 0x8, scoped, tag = 'scoped memory for tpu_custom_call.1']
    #allocation4 [shape = 's32[2]{0}', space=sflag, size = 0x8, scoped, tag = 'scoped memory for tpu_custom_call.1']
    #allocation5 [shape = 'u8[8192]{0}', space=vmem, size = 0x2000, scoped, tag = 'output window, operand 0']
    #allocation6 [shape = 'u8[1024]{0}', space=vmem, size = 0x400, scoped, tag = 'output window, operand 1, single buffered']
    #allocation7 [shape = 's32[1]{0}', space=sflag, size = 0x4, scoped, tag = 'scoped memory for tpu_custom_call.1']
    %11 = vsyncpa [#allocation3], 0
    %12 = vsyncpa [#allocation4], 0
    %s13 = scalar_lea.sflag [#allocation4], 1
    %14 = vsyncpa %s13, 0
    %15 = vsyncpa [#allocation7], 0
    loop: start=0, step=1, limit=4
    $region2: #{tpu_custom_call.1} parent=1 // loop_pre_header
      _
    $region3: #{tpu_custom_call.1} parent=1 // loop_header
      %s17 = sphi 0, %s21
      %p18 = scmp.ge.s32.totalorder %s17, 4
      %s24 = sphi 0, %s36
      %s25 = sphi 0, %s32
      %s26 = sphi 0, %s24
      %s27 = sphi 0, %s25
      %s28 = sphi 0, %s26
      %s29 = sphi 0, %s27
      %s43 = sphi 0, %s45
      %s46 = sphi 0, %s43
      %s47 = sphi 0, %s46
      %s63 = sphi 0, %s47
      %s67 = sphi 0, %s67
      %s69 = sphi 0, %s67
      %s70 = sphi 0, %s69
      %s84 = sphi 0, %s70
      %s88 = sphi 0, %s88
      %s90 = sphi 0, %s88
      %s91 = sphi 0, %s90
      %s105 = sphi 0, %s91
      %s115 = sphi 0, %s117
      %s118 = sphi 0, %s115
      %s119 = sphi 0, %s118
      %s135 = sphi 0, %s119
      %s145 = sphi 0, %s147
      %s148 = sphi 0, %s145
      %s149 = sphi 0, %s148
      %s165 = sphi 0, %s149
      %s171 = sphi 0, %s173
      %s174 = sphi 0, %s171
      %s175 = sphi 0, %s174
      %s191 = sphi 0, %s175
    $region4: #{tpu_custom_call.1} parent=1 // loop_header_branch
      %20 = sbr.rel (%p18) target = $region8
    $region5: #{tpu_custom_call.1} parent=1 // loop_body
      %s22 = ssub.s32 %s17, 1
      %s23 = ssub.s32 %s17, 2
      %s30 = sadd.s32 1, %s25
      %p31 = scmp.ge.s32.totalorder %s30, 2
      %s32 = scalar_select %p31, 0, %s30
      %s33 = sadd.s32 1, %s24
      %s34 = scalar_select %p31, %s33, %s24
      %p35 = scmp.ge.s32.totalorder %s34, 1
      %s36 = scalar_select %p35, 0, %s34
      %s37 = smul.u32 %s24, 2
      %s38 = sadd.s32 %s37, %s25
      %s39 = smul.u32 %s36, 2
      %s40 = sadd.s32 %s39, %s32
      %s41 = ssub.s32 %s38, %s40
      %p42 = scmp.eq.s32.totalorder %s41, 0
      %s44 = sadd.s32 %s43, 1
      %s45 = scalar_select %p42, %s43, %s44
      %p48 = pneg %p42
      %p49 = scmp.eq.s32.totalorder %s17, 1
      %p50 = por %p48, %p49
      %p51 = scmp.ne.s32.totalorder %s43, %s46
      %p52 = scmp.eq.s32.totalorder %s17, 0
      %p53 = por %p51, %p52
      %p54 = scmp.ne.s32.totalorder %s43, %s46
      %p55 = scmp.eq.s32.totalorder %s22, 1
      %p56 = por %p54, %p55
      %p57 = scmp.ne.s32.totalorder %s46, %s47
      %p58 = scmp.eq.s32.totalorder %s22, 0
      %p59 = por %p57, %p58
      %p60 = scmp.ne.s32.totalorder %s46, %s47
      %p61 = scmp.eq.s32.totalorder %s23, 1
      %p62 = por %p60, %p61
      %p64 = scmp.ne.s32.totalorder %s47, %s63
      %p65 = scmp.eq.s32.totalorder %s23, 0
      %p66 = por %p64, %p65
      %s68 = sadd.s32 %s67, 1
      %p71 = scmp.eq.s32.totalorder %s17, 1
      %p72 = scmp.ne.s32.totalorder %s67, %s69
      %p73 = scmp.eq.s32.totalorder %s17, 0
      %p74 = por %p72, %p73
      %p75 = scmp.ne.s32.totalorder %s67, %s69
      %p76 = scmp.eq.s32.totalorder %s22, 1
      %p77 = por %p75, %p76
      %p78 = scmp.ne.s32.totalorder %s69, %s70
      %p79 = scmp.eq.s32.totalorder %s22, 0
      %p80 = por %p78, %p79
      %p81 = scmp.ne.s32.totalorder %s69, %s70
      %p82 = scmp.eq.s32.totalorder %s23, 1
      %p83 = por %p81, %p82
      %p85 = scmp.ne.s32.totalorder %s70, %s84
      %p86 = scmp.eq.s32.totalorder %s23, 0
      %p87 = por %p85, %p86
      %s89 = sadd.s32 %s88, 1
      %p92 = scmp.eq.s32.totalorder %s17, 1
      %p93 = scmp.ne.s32.totalorder %s88, %s90
      %p94 = scmp.eq.s32.totalorder %s17, 0
      %p95 = por %p93, %p94
      %p96 = scmp.ne.s32.totalorder %s88, %s90
      %p97 = scmp.eq.s32.totalorder %s22, 1
      %p98 = por %p96, %p97
      %p99 = scmp.ne.s32.totalorder %s90, %s91
      %p100 = scmp.eq.s32.totalorder %s22, 0
      %p101 = por %p99, %p100
      %p102 = scmp.ne.s32.totalorder %s90, %s91
      %p103 = scmp.eq.s32.totalorder %s23, 1
      %p104 = por %p102, %p103
      %p106 = scmp.ne.s32.totalorder %s91, %s105
      %p107 = scmp.eq.s32.totalorder %s23, 0
      %p108 = por %p106, %p107
      %s109 = smul.u32 %s24, 2
      %s110 = sadd.s32 %s109, %s25
      %s111 = smul.u32 %s36, 2
      %s112 = sadd.s32 %s111, %s32
      %s113 = ssub.s32 %s110, %s112
      %p114 = scmp.eq.s32.totalorder %s113, 0
      %s116 = sadd.s32 %s115, 1
      %s117 = scalar_select %p114, %s115, %s116
      %p120 = pneg %p114
      %p121 = scmp.eq.s32.totalorder %s17, 1
      %p122 = por %p120, %p121
      %p123 = scmp.ne.s32.totalorder %s115, %s118
      %p124 = scmp.eq.s32.totalorder %s17, 0
      %p125 = por %p123, %p124
      %p126 = scmp.ne.s32.totalorder %s115, %s118
      %p127 = scmp.eq.s32.totalorder %s22, 1
      %p128 = por %p126, %p127
      %p129 = scmp.ne.s32.totalorder %s118, %s119
      %p130 = scmp.eq.s32.totalorder %s22, 0
      %p131 = por %p129, %p130
      %p132 = scmp.ne.s32.totalorder %s118, %s119
      %p133 = scmp.eq.s32.totalorder %s23, 1
      %p134 = por %p132, %p133
      %p136 = scmp.ne.s32.totalorder %s119, %s135
      %p137 = scmp.eq.s32.totalorder %s23, 0
      %p138 = por %p136, %p137
      %s139 = smul.u32 %s24, 2
      %s140 = sadd.s32 %s139, %s25
      %s141 = smul.u32 %s36, 2
      %s142 = sadd.s32 %s141, %s32
      %s143 = ssub.s32 %s140, %s142
      %p144 = scmp.eq.s32.totalorder %s143, 0
      %s146 = sadd.s32 %s145, 1
      %s147 = scalar_select %p144, %s145, %s146
      %p150 = pneg %p144
      %p151 = scmp.eq.s32.totalorder %s17, 1
      %p152 = por %p150, %p151
      %p153 = scmp.ne.s32.totalorder %s145, %s148
      %p154 = scmp.eq.s32.totalorder %s17, 0
      %p155 = por %p153, %p154
      %p156 = scmp.ne.s32.totalorder %s145, %s148
      %p157 = scmp.eq.s32.totalorder %s22, 1
      %p158 = por %p156, %p157
      %p159 = scmp.ne.s32.totalorder %s148, %s149
      %p160 = scmp.eq.s32.totalorder %s22, 0
      %p161 = por %p159, %p160
      %p162 = scmp.ne.s32.totalorder %s148, %s149
      %p163 = scmp.eq.s32.totalorder %s23, 1
      %p164 = por %p162, %p163
      %p166 = scmp.ne.s32.totalorder %s149, %s165
      %p167 = scmp.eq.s32.totalorder %s23, 0
      %p168 = por %p166, %p167
      %s169 = ssub.s32 %s24, %s36
      %p170 = scmp.eq.s32.totalorder %s169, 0
      %s172 = sadd.s32 %s171, 1
      %s173 = scalar_select %p170, %s171, %s172
      %p176 = pneg %p170
      %p177 = scmp.eq.s32.totalorder %s17, 1
      %p178 = por %p176, %p177
      %p179 = scmp.ne.s32.totalorder %s171, %s174
      %p180 = scmp.eq.s32.totalorder %s17, 0
      %p181 = por %p179, %p180
      %p182 = scmp.ne.s32.totalorder %s171, %s174
      %p183 = scmp.eq.s32.totalorder %s22, 1
      %p184 = por %p182, %p183
      %p185 = scmp.ne.s32.totalorder %s174, %s175
      %p186 = scmp.eq.s32.totalorder %s22, 0
      %p187 = por %p185, %p186
      %p188 = scmp.ne.s32.totalorder %s174, %s175
      %p189 = scmp.eq.s32.totalorder %s23, 1
      %p190 = por %p188, %p189
      %p192 = scmp.ne.s32.totalorder %s175, %s191
      %p193 = scmp.eq.s32.totalorder %s23, 0
      %p194 = por %p192, %p193
      %p195 = scmp.le.s32.totalorder 1, %s17
      %p196 = scmp.lt.s32.totalorder %s17, 3
      %p197 = pnand %p195, %p196
      %p198 = pneg %p197
      // Predicated region
      $region9: #{tpu_custom_call.1} parent=5 // pred_check
        _
      $region10: #{tpu_custom_call.1} parent=5 // pred_check_branch
        %200 = sbr.rel (%p197) target = $region12
      $region11: #{tpu_custom_call.1} parent=5 // pred_region
        %s201 = ssub.s32 %s17, 1
        // Predicated region
        $region13: #{tpu_custom_call.1} parent=11 // pred_check
          %p202 = pneg %p80
        $region14: #{tpu_custom_call.1} parent=11 // pred_check_branch
          %204 = sbr.rel (%p202) target = $region16
        $region15: #{tpu_custom_call.1} parent=11 // pred_region
          %s206 = ssub.s32 512, 512
          %207 = vsyncadd [#allocation3], %s206
          %s208 = sshll.u32 [#allocation2], 4
          %s209 = int_to_ptr.vmem [resolvable:$true] %s208
          %214 = dma.hbm_to_vmem [thread:$0]  %s1, 512, %s209, [#allocation3], 128, 128, 8
        $region16: #{tpu_custom_call.1} parent=11 // pred_fallthru
          _
        // Predicated region
        $region17: #{tpu_custom_call.1} parent=11 // pred_check
          %p215 = pneg %p101
        $region18: #{tpu_custom_call.1} parent=11 // pred_check_branch
          %217 = sbr.rel (%p215) target = $region20
        $region19: #{tpu_custom_call.1} parent=11 // pred_region
          _
        $region20: #{tpu_custom_call.1} parent=11 // pred_fallthru
          _
      $region12: #{tpu_custom_call.1} parent=5 // pred_fallthru
        _
      %p218 = scmp.lt.s32.totalorder %s17, 2
      // Predicated region
      $region21: #{tpu_custom_call.1} parent=5 // pred_check
        %p219 = pneg %p218
      $region22: #{tpu_custom_call.1} parent=5 // pred_check_branch
        %221 = sbr.rel (%p219) target = $region24
      $region23: #{tpu_custom_call.1} parent=5 // pred_region
        // Predicated region
        $region25: #{tpu_custom_call.1} parent=23 // pred_check
          %p222 = pneg %p53
        $region26: #{tpu_custom_call.1} parent=23 // pred_check_branch
          %224 = sbr.rel (%p222) target = $region28
        $region27: #{tpu_custom_call.1} parent=23 // pred_region
          %s225 = smul.u32 %s24, 2
          %s226 = sadd.s32 %s225, %s25
          %p227 = scmp.lt.s32.totalorder %s226, 1
          %s228 = scalar_select %p227, %s226, 1
          %s229 = smul.addr %s228, 8
          %s230 = scalar_lea.vmem %s0, %s229
          %s231 = smul.u32 %s24, 2
          %s232 = sadd.s32 %s231, %s25
        $region28: #{tpu_custom_call.1} parent=23 // pred_fallthru
          _
        // Predicated region
        $region29: #{tpu_custom_call.1} parent=23 // pred_check
          %p233 = pneg %p125
        $region30: #{tpu_custom_call.1} parent=23 // pred_check_branch
          %235 = sbr.rel (%p233) target = $region32
        $region31: #{tpu_custom_call.1} parent=23 // pred_region
          %s236 = smul.u32 %s24, 2
          %s237 = sadd.s32 %s236, %s25
          %p238 = scmp.lt.s32.totalorder %s237, 1
          %s239 = scalar_select %p238, %s237, 1
          %s240 = smul.addr %s239, 8
          %s241 = scalar_lea.vmem %s3, %s240
          %s242 = smul.u32 %s24, 2
          %s243 = sadd.s32 %s242, %s25
        $region32: #{tpu_custom_call.1} parent=23 // pred_fallthru
          _
      $region24: #{tpu_custom_call.1} parent=5 // pred_fallthru
        _
      %p244 = scmp.le.s32.totalorder 1, %s17
      %p245 = scmp.lt.s32.totalorder %s17, 3
      %p246 = pnand %p244, %p245
      %p247 = pneg %p246
      // Predicated region
      $region33: #{tpu_custom_call.1} parent=5 // pred_check
        _
      $region34: #{tpu_custom_call.1} parent=5 // pred_check_branch
        %249 = sbr.rel (%p246) target = $region36
      $region35: #{tpu_custom_call.1} parent=5 // pred_region
        %s250 = ssub.s32 %s17, 1
        // Predicated region
        $region37: #{tpu_custom_call.1} parent=35 // pred_check
          %p251 = pneg %p80
        $region38: #{tpu_custom_call.1} parent=35 // pred_check_branch
          %253 = sbr.rel (%p251) target = $region40
        $region39: #{tpu_custom_call.1} parent=35 // pred_region
          %254 = dma.done [#allocation3], 512
        $region40: #{tpu_custom_call.1} parent=35 // pred_fallthru
          _
        %s255 = smul.u32 %s26, 2
        %s256 = sadd.s32 %s255, %s27
        %p257 = scmp.lt.s32.totalorder %s256, 1
        %s258 = scalar_select %p257, %s256, 1
        %s259 = smul.addr %s258, 8
        %s260 = scalar_lea.vmem %s0, %s259
        %p261 = pneg %p59
        %p262 = pneg %p56
        %p263 = pneg %p80
        %p264 = pneg %p77
        %p265 = pneg %p101
        %p266 = pneg %p98
        %s267 = smul.u32 %s26, 2
        %s268 = sadd.s32 %s267, %s27
        %p269 = scmp.lt.s32.totalorder %s268, 1
        %s270 = scalar_select %p269, %s268, 1
        %s271 = smul.addr %s270, 8
        %s272 = scalar_lea.vmem %s3, %s271
        %p273 = pneg %p131
        %p274 = pneg %p128
        %p275 = pneg %p161
        %p276 = pneg %p158
        %s277 = sand.u32 %s148, 1
        %s278 = scalar_lea.sflag [#allocation4], %s277
        %s279 = sand.u32 %s148, 1
        %s280 = smul.addr %s279, 8
        %s281 = scalar_lea.vmem [#allocation5], %s280
        %p282 = pneg %p187
        %p283 = pneg %p184
        %s284 = smul.u32 %s26, 2
        %s285 = sadd.s32 %s284, %s27
        %p286 = scmp.lt.s32.totalorder %s285, 1
        %s287 = scalar_select %p286, %s285, 1
        %s288 = smul.addr %s287, 8
        %s289 = scalar_lea.vmem %s0, %s288
        %s290 = smul.u32 %s26, 2
        %s291 = sadd.s32 %s290, %s27
        %s292 = smul.u32 %s26, 2
        %s293 = sadd.s32 %s292, %s27
        %p294 = scmp.lt.s32.totalorder %s293, 1
        %s295 = scalar_select %p294, %s293, 1
        %s296 = smul.addr %s295, 8
        %s297 = scalar_lea.vmem %s3, %s296
        %s298 = smul.u32 %s26, 2
        %s299 = sadd.s32 %s298, %s27
        %s300 = smul.u32 %s26, 2
        %s301 = sadd.s32 %s300, %s27
        %p302 = scmp.eq.s32.totalorder %s27, 0
        // Predicated region
        $region41: #{tpu_custom_call.1} parent=35 // pred_check
          %p303 = pneg %p302
        $region42: #{tpu_custom_call.1} parent=35 // pred_check_branch
          %305 = sbr.rel (%p303) target = $region44
        $region43: #{tpu_custom_call.1} parent=35 // pred_region
          %306 = vst [vmem:[#allocation6] sm:$0x3] 0.0
        $region44: #{tpu_custom_call.1} parent=35 // pred_fallthru
          _
        %v307 = vld [vmem:[%s289] sm:$0xff]
        %v308 = vld [vmem:[#allocation2] sm:$0xff]
        %v309 = vld [vmem:[#allocation2 + $0x8] sm:$0xff]
        %v310 = vld [vmem:[#allocation2 + $0x10] sm:$0xff]
        %v311 = vld [vmem:[#allocation2 + $0x18] sm:$0xff]
        %v312 = vld [vmem:[%s2] sm:$0x1]
        %v314 = vlaneseq
        %v315 = vshrl.u32 %v314, 7
        %v316 = vsub.s32 0, %v315
        %v317 = vrot.slane %v312, %v316
        %vm319 = vcmask 261120
        %v321 = vsel %vm319, %v307, 0
        %323 = vmatprep.subr.mxu0 0.0
        %324 = vmatpush1.msra.mxu0 %v308
        %325 = vmatprep.subr.mxu0 0.0
        %326 = vmatpush1.msra.mxu0 %v309
        %327 = vmatprep.subr.mxu0 0.0
        %328 = vmatpush1.msra.mxu0 %v310
        %329 = vmatprep.subr.mxu0 0.0
        %330 = vmatpush1.msra.mxu0 %v311
        %331 = vmatprep.subr.mxu0 0.0
        %332 = vmatpush1.msra.mxu0 0.0
        %333 = vmatprep.subr.mxu0 0.0
        %334 = vmatpush1.msra.mxu0 0.0
        %335 = vmatprep.subr.mxu0 0.0
        %336 = vmatpush1.msra.mxu0 0.0
        %337 = vmatprep.subr.mxu0 0.0
        %338 = vmatpush1.msra.mxu0 0.0
        %339 = vmatprep.subr.mxu0 0.0
        %340 = vmatpush1.msra.mxu0 0.0
        %341 = vmatprep.subr.mxu0 0.0
        %342 = vmatpush1.msra.mxu0 0.0
        %343 = vmatprep.subr.mxu0 0.0
        %344 = vmatpush1.msra.mxu0 0.0
        %345 = vmatprep.subr.mxu0 0.0
        %346 = vmatpush1.msra.mxu0 0.0
        %347 = vmatprep.subr.mxu0 0.0
        %348 = vmatpush1.msra.mxu0 0.0
        %349 = vmatprep.subr.mxu0 0.0
        %350 = vmatpush1.msra.mxu0 0.0
        %351 = vmatprep.subr.mxu0 0.0
        %352 = vmatpush1.msra.mxu0 0.0
        %353 = vmatprep.subr.mxu0 0.0
        %354 = vmatpush1.msra.mxu0 0.0
        %355 = vmatprep.subr.mxu0 0.0
        %356 = vmatpush1.msra.mxu0 0.0
        %357 = vmatprep.subr.mxu0 0.0
        %358 = vmatpush1.msra.mxu0 0.0
        %359 = vmatprep.subr.mxu0 0.0
        %360 = vmatpush1.msra.mxu0 0.0
        %361 = vmatprep.subr.mxu0 0.0
        %362 = vmatpush1.msra.mxu0 0.0
        %363 = vmatprep.subr.mxu0 0.0
        %364 = vmatpush1.msra.mxu0 0.0
        %365 = vmatprep.subr.mxu0 0.0
        %366 = vmatpush1.msra.mxu0 0.0
        %367 = vmatprep.subr.mxu0 0.0
        %368 = vmatpush1.msra.mxu0 0.0
        %369 = vmatprep.subr.mxu0 0.0
        %370 = vmatpush1.msra.mxu0 0.0
        %371 = vmatprep.subr.mxu0 0.0
        %372 = vmatpush1.msra.mxu0 0.0
        %373 = vmatprep.subr.mxu0 0.0
        %374 = vmatpush1.msra.mxu0 0.0
        %375 = vmatprep.subr.mxu0 0.0
        %376 = vmatpush1.msra.mxu0 0.0
        %377 = vmatprep.subr.mxu0 0.0
        %378 = vmatpush1.msra.mxu0 0.0
        %379 = vmatprep.subr.mxu0 0.0
        %380 = vmatpush1.msra.mxu0 0.0
        %381 = vmatprep.subr.mxu0 0.0
        %382 = vmatpush1.msra.mxu0 0.0
        %383 = vmatprep.subr.mxu0 0.0
        %384 = vmatpush1.msra.mxu0 0.0
        %385 = vmatprep.subr.mxu0 0.0
        %386 = vmatpush1.msra.mxu0 0.0
        %387 = vmatprep.mubr.f32.mxu0 0.0
        %388 = vmatmul.mubr.f32.gmra.mrb[0].mxu0 %v321
        %v389 = vpop.f32.mrb[0].mxu0
        %v390 = vadd.f32 %v317, %v389
        %v391 = vpop.f32.mrb[0].mxu0
        %392 = vdwg.mxu0
        %v393 = vtanh.pop %v390
        %394 = vst [vmem:[%s281] sm:$0xff] %v393
        %v395 = vld [vmem:[%s297] sm:$0xff]
        %397 = vset.pattern.permute.xlu0 0
        %398 = vperm.xlu0 %397, %v395
        %v399 = vpop.permute.xlu0 %398
        %v401 = vmul.f32 %v393, %v399
        %v402 = vadd.f32 %v401, 0.0
        %v404 = vrot.slane %v402, 2
        %v406 = vadd.f32 %v402, %v404
        %v407 = vrot.slane %v402, 4
        %v409 = vadd.f32 %v406, %v407
        %v410 = vrot.slane %v402, 6
        %v412 = vadd.f32 %v409, %v410
        %v413 = vld [vmem:[#allocation6] sm:$0x3]
        %v414 = vadd.f32 %v413, %v412
        %415 = vst [vmem:[#allocation6] sm:$0x3] %v414
        %s416 = sand.u32 %s148, 1
        %s417 = scalar_lea.sflag [#allocation4], %s416
        %s418 = sand.u32 %s148, 1
        %s419 = smul.addr %s418, 8
        %s420 = scalar_lea.vmem [#allocation5], %s419
        // Predicated region
        $region45: #{tpu_custom_call.1} parent=35 // pred_check
          %p421 = pneg %p158
        $region46: #{tpu_custom_call.1} parent=35 // pred_check_branch
          %423 = sbr.rel (%p421) target = $region48
        $region47: #{tpu_custom_call.1} parent=35 // pred_region
          %s424 = smul.u32 %s26, 2
          %s425 = sadd.s32 %s424, %s27
          %s427 = ssub.s32 128, 128
          %428 = vsyncadd %s417, %s427
          %s429 = smul.addr %s425, 128
          %s430 = scalar_lea.hbm %s4, %s429
          %s432 = sshll.u32 %s420, 4
          %s433 = int_to_ptr.vmem [resolvable:$true] %s432
          %435 = dma.vmem_to_hbm [thread:$0]  %s433, 128, %s430, %s417
        $region48: #{tpu_custom_call.1} parent=35 // pred_fallthru
          _
        // Predicated region
        $region49: #{tpu_custom_call.1} parent=35 // pred_check
          %p436 = pneg %p184
        $region50: #{tpu_custom_call.1} parent=35 // pred_check_branch
          %438 = sbr.rel (%p436) target = $region52
        $region51: #{tpu_custom_call.1} parent=35 // pred_region
          %s440 = ssub.s32 32, 32
          %441 = vsyncadd [#allocation7], %s440
          %s442 = smul.addr %s26, 32
          %s443 = scalar_lea.hbm %s5, %s442
          %s445 = sshll.u32 [#allocation6], 4
          %s446 = int_to_ptr.vmem [resolvable:$true] %s445
          %448 = dma.vmem_to_hbm [thread:$0]  %s446, 32, %s443, [#allocation7]
        $region52: #{tpu_custom_call.1} parent=35 // pred_fallthru
          _
        // Predicated region
        $region53: #{tpu_custom_call.1} parent=35 // pred_check
          %p449 = pneg %p184
        $region54: #{tpu_custom_call.1} parent=35 // pred_check_branch
          %451 = sbr.rel (%p449) target = $region56
        $region55: #{tpu_custom_call.1} parent=35 // pred_region
          %452 = dma.done [#allocation7], 32
        $region56: #{tpu_custom_call.1} parent=35 // pred_fallthru
          _
      $region36: #{tpu_custom_call.1} parent=5 // pred_fallthru
        _
      %p453 = scmp.le.s32.totalorder 2, %s17
      // Predicated region
      $region57: #{tpu_custom_call.1} parent=5 // pred_check
        %p454 = pneg %p453
      $region58: #{tpu_custom_call.1} parent=5 // pred_check_branch
        %456 = sbr.rel (%p454) target = $region60
      $region59: #{tpu_custom_call.1} parent=5 // pred_region
        %s457 = ssub.s32 %s17, 2
        // Predicated region
        $region61: #{tpu_custom_call.1} parent=59 // pred_check
          %p458 = pneg %p164
        $region62: #{tpu_custom_call.1} parent=59 // pred_check_branch
          %460 = sbr.rel (%p458) target = $region64
        $region63: #{tpu_custom_call.1} parent=59 // pred_region
          %s461 = sand.u32 %s149, 1
          %s462 = scalar_lea.sflag [#allocation4], %s461
          %s463 = sand.u32 %s149, 1
          %s464 = smul.addr %s463, 8
          %s465 = scalar_lea.vmem [#allocation5], %s464
          %466 = dma.done %s462, 128
        $region64: #{tpu_custom_call.1} parent=59 // pred_fallthru
          _
      $region60: #{tpu_custom_call.1} parent=5 // pred_fallthru
        _
    $region6: #{tpu_custom_call.1} parent=1 // loop_footer
      %s21 = sadd.s32 1, %s17
    $region7: #{tpu_custom_call.1} parent=1 // loop_footer_branch
      %16 = sbr.rel target = $region3
    $region8: #{tpu_custom_call.1} parent=1 // loop_exit
      _
    %467 = vsyncpa [#allocation3], 1
    %s468 = scalar_lea.sflag [#allocation3], 1
    %469 = vsyncpa %s468, 1
    %470 = vsyncpa [#allocation4], 1
    %s471 = scalar_lea.sflag [#allocation4], 1
    %472 = vsyncpa %s471, 1
    %473 = vsyncpa [#allocation7], 1

</llo_original>
